<compile_context>
chip_gen: v7x
topology: tpu7x:2x2x1
jax: 0.10.0
libtpu: 0.0.40
codegen_flags: <defaults>
</compile_context>

<pallas_src>
import functools

import jax
import jax.numpy as jnp
from jax.experimental import pallas as pl
from jax.experimental.pallas import tpu as pltpu

LANE = 128
SUBLANE = 8


def _round_up(x, m):
    return (x + m - 1) // m * m


# ----------------------------------------------------------------------------
# Kernel: one batch tile.
# ----------------------------------------------------------------------------
def _actor_kernel(x_ref, avail_ref, hlast_ref,
                  w1_ref, b1_ref, wi_ref, wh_ref, bi_ref, bh_ref,
                  w2_ref, b2_ref,
                  y_ref, hout_ref, *, hidden):
    H = hidden
    x = x_ref[...]                                   # (TB, D)  bf16
    h_last = hlast_ref[...]                          # (TB, H)  f32

    # ---- fc1 + ReLU (bf16 MXU, f32 accumulate) -----------------------------
    h1 = jnp.dot(x, w1_ref[...], preferred_element_type=jnp.float32) + b1_ref[...]
    h1 = jnp.maximum(h1, 0.0)                        # (TB, H)  f32

    # ---- GRUCell: two un-fused matmuls, gates packed densely [r|z|n] --------
    gi = jnp.dot(h1.astype(jnp.bfloat16), wi_ref[...],
                 preferred_element_type=jnp.float32) + bi_ref[...]      # (TB, Gp)
    # recurrent path kept in f32 (per review correctness concern)
    gh = jnp.dot(h_last, wh_ref[...],
                 preferred_element_type=jnp.float32) + bh_ref[...]      # (TB, Gp)

    r = jax.nn.sigmoid(gi[:, 0:H] + gh[:, 0:H])
    z = jax.nn.sigmoid(gi[:, H:2 * H] + gh[:, H:2 * H])
    n = jnp.tanh(gi[:, 2 * H:3 * H] + r * gh[:, 2 * H:3 * H])
    h_new = (1.0 - z) * n + z * h_last               # (TB, H)  f32

    # ---- fc2 + in-kernel additive avail mask + exact softmax ----------------
    y = jnp.dot(h_new.astype(jnp.bfloat16), w2_ref[...],
                preferred_element_type=jnp.float32) + b2_ref[...]       # (TB, A)
    # avail is exactly 0/1 -> additive mask: 0 if available, -1e30 otherwise.
    y = y + (avail_ref[...].astype(jnp.float32) - 1.0) * 1e30
    m = jnp.max(y, axis=-1, keepdims=True)
    e = jnp.exp(y - m)                               # masked entries underflow to 0
    s = jnp.sum(e, axis=-1, keepdims=True)
    y_ref[...] = e / s                               # EXACT normalization
    hout_ref[...] = h_new


# ----------------------------------------------------------------------------
# One-time weight preparation (transpose, densely pack GRU gates, cast the
# non-recurrent matmul operands to bf16).  Done once, reused every step.
# ----------------------------------------------------------------------------
def prepare_params(params, input_dim, hidden, n_actions):
    H = hidden
    G = 3 * H
    Gp = _round_up(G, LANE)          # dense [r|z|n] gate width, one lane tile at H<=42

    w1_t = params["fc1_w"].T.astype(jnp.bfloat16)                      # (D, H)
    b1 = params["fc1_b"].reshape(1, H).astype(jnp.float32)

    wih, whh = params["rnn_wih"], params["rnn_whh"]                    # (3H, H)
    bih, bhh = params["rnn_bih"], params["rnn_bhh"]                    # (3H,)
    # PyTorch GRUCell stacks [W_r; W_z; W_n] along dim 0 -> transposing gives
    # the dense [r|z|n] column packing directly.
    wi_t = jnp.zeros((H, Gp), jnp.float32).at[:, :G].set(wih.T).astype(jnp.bfloat16)
    wh_t = jnp.zeros((H, Gp), jnp.float32).at[:, :G].set(whh.T)        # f32 (recurrent)
    bi = jnp.zeros((1, Gp), jnp.float32).at[0, :G].set(bih)
    bh = jnp.zeros((1, Gp), jnp.float32).at[0, :G].set(bhh)

    w2_t = params["fc2_w"].T.astype(jnp.bfloat16)                      # (H, A)
    b2 = params["fc2_b"].reshape(1, n_actions).astype(jnp.float32)

    return dict(w1_t=w1_t, b1=b1, wi_t=wi_t, wh_t=wh_t, bi=bi, bh=bh,
                w2_t=w2_t, b2=b2)


# ----------------------------------------------------------------------------
# Wrapper: batch-tile, pad batch to the tile, launch the gridded pallas_call.
# ----------------------------------------------------------------------------
def actor_forward(inputs, avail_actions, h_last, prepped):
    B, input_dim = inputs.shape
    H = h_last.shape[1]
    A = avail_actions.shape[1]
    Gp = prepped["bi"].shape[1]

    # Batch tile: multiple of 8 sublanes, capped at 512 rows; aim for >=2 grid
    # steps when B is large so the "parallel" axis can shard across 2 TCs (v7x).
    TB = max(SUBLANE, min(512, _round_up(max((B + 1) // 2, 1), SUBLANE)))
    Bp = _round_up(B, TB)
    nb = Bp // TB

    # Batch-pad only; feature dims stay at their logical sizes (blocks equal
    # the full array dims, so no 128-lane zero padding / wasted MXU work).
    x_p = jnp.zeros((Bp, input_dim), jnp.bfloat16).at[:B].set(inputs.astype(jnp.bfloat16))
    h_p = jnp.zeros((Bp, H), jnp.float32).at[:B].set(h_last.astype(jnp.float32))
    a_p = jnp.zeros((Bp, A), jnp.bfloat16).at[:B].set(avail_actions.astype(jnp.bfloat16))

    row = lambda i: (i, 0)       # batch-tiled operands
    fixed = lambda i: (0, 0)     # weights/biases: VMEM-resident across grid steps
    # TODO(synk): for an RNN rollout driver, add a trailing "arbitrary" time axis
    # to the grid and carry h in VMEM scratch (dominant win at small B); also
    # consider pipeline_mode=pl.Buffered(1) on the weight specs if hidden scales.

    y_p, h_new_p = pl.pallas_call(
        functools.partial(_actor_kernel, hidden=H),
        grid=(nb,),
        in_specs=[
            pl.BlockSpec((TB, input_dim), row),     # x
            pl.BlockSpec((TB, A), row),             # avail (0/1)
            pl.BlockSpec((TB, H), row),             # h_last
            pl.BlockSpec((input_dim, H), fixed),    # fc1 weight (T)
            pl.BlockSpec((1, H), fixed),            # fc1 bias
            pl.BlockSpec((H, Gp), fixed),           # GRU input->gates weight (T, dense)
            pl.BlockSpec((H, Gp), fixed),           # GRU hidden->gates weight (T, dense)
            pl.BlockSpec((1, Gp), fixed),           # GRU input bias (dense)
            pl.BlockSpec((1, Gp), fixed),           # GRU hidden bias (dense)
            pl.BlockSpec((H, A), fixed),            # fc2 weight (T)
            pl.BlockSpec((1, A), fixed),            # fc2 bias
        ],
        out_specs=(
            pl.BlockSpec((TB, A), row),
            pl.BlockSpec((TB, H), row),
        ),
        out_shape=(
            jax.ShapeDtypeStruct((Bp, A), jnp.float32),
            jax.ShapeDtypeStruct((Bp, H), jnp.float32),
        ),
        compiler_params=pltpu.CompilerParams(
            dimension_semantics=("parallel",),      # batch tiles are independent
            vmem_limit_bytes=48 * 1024 * 1024,      # fits v7x's 64 MiB; raise on v5e/v6e
        ),
    )(x_p, a_p, h_p,
      prepped["w1_t"], prepped["b1"],
      prepped["wi_t"], prepped["wh_t"], prepped["bi"], prepped["bh"],
      prepped["w2_t"], prepped["b2"])

    return y_p[:B], h_new_p[:B]


# ----------------------------------------------------------------------------
# Reference (pure JAX, f32) and param init in the PyTorch layout.
# ----------------------------------------------------------------------------
def actor_reference(inputs, avail, h_last, params):
    h1 = jnp.maximum(inputs @ params["fc1_w"].T + params["fc1_b"], 0.0)
    gi = h1 @ params["rnn_wih"].T + params["rnn_bih"]
    gh = h_last @ params["rnn_whh"].T + params["rnn_bhh"]
    H = h_last.shape[1]
    r = jax.nn.sigmoid(gi[:, :H] + gh[:, :H])
    z = jax.nn.sigmoid(gi[:, H:2 * H] + gh[:, H:2 * H])
    n = jnp.tanh(gi[:, 2 * H:] + r * gh[:, 2 * H:])
    h_new = (1.0 - z) * n + z * h_last
    y = h_new @ params["fc2_w"].T + params["fc2_b"]
    y = jnp.where(avail == 0, -jnp.inf, y)
    return jax.nn.softmax(y, axis=-1), h_new


def init_params(key, input_dim, hidden, n_actions):
    ks = jax.random.split(key, 8)
    u = lambda k, shape, bound: jax.random.uniform(
        k, shape, jnp.float32, minval=-bound, maxval=bound)
    b1 = 1.0 / jnp.sqrt(input_dim)
    bh = 1.0 / jnp.sqrt(hidden)
    return {
        "fc1_w": u(ks[0], (hidden, input_dim), b1),
        "fc1_b": u(ks[1], (hidden,), b1),
        "rnn_wih": u(ks[2], (3 * hidden, hidden), bh),
        "rnn_whh": u(ks[3], (3 * hidden, hidden), bh),
        "rnn_bih": u(ks[4], (3 * hidden,), bh),
        "rnn_bhh": u(ks[5], (3 * hidden,), bh),
        "fc2_w": u(ks[6], (n_actions, hidden), bh),
        "fc2_b": u(ks[7], (n_actions,), bh),
    }


if __name__ == "__main__":
    # Small shapes consistent with the module: batch=2, input_dim=16,
    # rnn_hidden_dim=32, n_actions=8.
    B, INPUT_DIM, HIDDEN, N_ACTIONS = 2, 16, 32, 8

    key = jax.random.PRNGKey(0)
    k_params, k_x, k_h, k_avail = jax.random.split(key, 4)

    params = init_params(k_params, INPUT_DIM, HIDDEN, N_ACTIONS)
    prepped = prepare_params(params, INPUT_DIM, HIDDEN, N_ACTIONS)  # once

    x = jax.random.normal(k_x, (B, INPUT_DIM), jnp.float32)
    h_last = jax.random.normal(k_h, (B, HIDDEN), jnp.float32)
    # Random availability mask with at least one available action per row.
    avail = (jax.random.uniform(k_avail, (B, N_ACTIONS)) > 0.5).astype(jnp.float32)
    avail = avail.at[:, 0].set(1.0)

    fwd = jax.jit(actor_forward)
    probs, h_new = fwd(x, avail, h_last, prepped)
    jax.block_until_ready((probs, h_new))

    # Sanity: probabilities sum to 1 (exact normalization), masked actions get
    # exactly zero probability, and results track the f32 reference
    # (bf16 MXU on the non-recurrent paths -> loose tolerance).
    ref_p, ref_h = actor_reference(x, avail, h_last, params)
    assert jnp.allclose(jnp.sum(probs, axis=-1), 1.0, atol=1e-3)
    assert jnp.all(jnp.where(avail == 0, probs, 0.0) == 0.0)
    assert jnp.allclose(probs, ref_p, atol=5e-2)
    assert jnp.allclose(h_new, ref_h, atol=5e-2)

    print("KERNEL_OK")
</pallas_src>

<mosaic_0001>
module attributes {stable_mosaic.version = 11 : i64} {
  func.func @_actor_kernel(%arg0: i32, %arg1: memref<8x16xbf16, #tpu.memory_space<vmem>>, %arg2: memref<8x8xbf16, #tpu.memory_space<vmem>>, %arg3: memref<8x32xf32, #tpu.memory_space<vmem>>, %arg4: memref<16x32xbf16, #tpu.memory_space<vmem>>, %arg5: memref<1x32xf32, #tpu.memory_space<vmem>>, %arg6: memref<32x128xbf16, #tpu.memory_space<vmem>>, %arg7: memref<32x128xf32, #tpu.memory_space<vmem>>, %arg8: memref<1x128xf32, #tpu.memory_space<vmem>>, %arg9: memref<1x128xf32, #tpu.memory_space<vmem>>, %arg10: memref<32x8xbf16, #tpu.memory_space<vmem>>, %arg11: memref<1x8xf32, #tpu.memory_space<vmem>>, %arg12: memref<8x8xf32, #tpu.memory_space<vmem>>, %arg13: memref<8x32xf32, #tpu.memory_space<vmem>>) attributes {dimension_semantics = [#tpu.dimension_semantics<parallel>], iteration_bounds = array<i64: 1>, scalar_prefetch = 0 : i64, scratch_operands = 0 : i64, tpu.core_type = #tpu.core_type<tc>, window_params = [{transform_indices = @transform_0, window_bounds = array<i64: 8, 16>}, {transform_indices = @transform_1, window_bounds = array<i64: 8, 8>}, {transform_indices = @transform_2, window_bounds = array<i64: 8, 32>}, {pipeline_mode = #tpu.pipeline_mode<synchronous>, transform_indices = @transform_3, window_bounds = array<i64: 16, 32>}, {pipeline_mode = #tpu.pipeline_mode<synchronous>, transform_indices = @transform_4, window_bounds = array<i64: 1, 32>}, {pipeline_mode = #tpu.pipeline_mode<synchronous>, transform_indices = @transform_5, window_bounds = array<i64: 32, 128>}, {pipeline_mode = #tpu.pipeline_mode<synchronous>, transform_indices = @transform_6, window_bounds = array<i64: 32, 128>}, {pipeline_mode = #tpu.pipeline_mode<synchronous>, transform_indices = @transform_7, window_bounds = array<i64: 1, 128>}, {pipeline_mode = #tpu.pipeline_mode<synchronous>, transform_indices = @transform_8, window_bounds = array<i64: 1, 128>}, {pipeline_mode = #tpu.pipeline_mode<synchronous>, transform_indices = @transform_9, window_bounds = array<i64: 32, 8>}, {pipeline_mode = #tpu.pipeline_mode<synchronous>, transform_indices = @transform_10, window_bounds = array<i64: 1, 8>}, {transform_indices = @transform_11, window_bounds = array<i64: 8, 8>}, {transform_indices = @transform_12, window_bounds = array<i64: 8, 32>}]} {
    %c0 = arith.constant 0 : index
    %c0_0 = arith.constant 0 : index
    %0 = vector.load %arg1[%c0, %c0_0] : memref<8x16xbf16, #tpu.memory_space<vmem>>, vector<8x16xbf16>
    %c0_1 = arith.constant 0 : index
    %c0_2 = arith.constant 0 : index
    %1 = vector.load %arg3[%c0_1, %c0_2] : memref<8x32xf32, #tpu.memory_space<vmem>>, vector<8x32xf32>
    %c0_3 = arith.constant 0 : index
    %c0_4 = arith.constant 0 : index
    %2 = vector.load %arg4[%c0_3, %c0_4] : memref<16x32xbf16, #tpu.memory_space<vmem>>, vector<16x32xbf16>
    %cst = arith.constant dense<0.000000e+00> : vector<8x32xf32>
    %3 = tpu.matmul %0, %2, %cst {dimension_numbers = #tpu.dot_dimension_numbers<[1], [0], [0], [1], [0, 0, 1, 1], [], []>} : vector<8x16xbf16>, vector<16x32xbf16>, vector<8x32xf32> -> vector<8x32xf32>
    %c0_5 = arith.constant 0 : index
    %c0_6 = arith.constant 0 : index
    %4 = vector.load %arg5[%c0_5, %c0_6] : memref<1x32xf32, #tpu.memory_space<vmem>>, vector<1x32xf32>
    %5 = vector.broadcast %4 : vector<1x32xf32> to vector<8x32xf32>
    %6 = arith.addf %3, %5 : vector<8x32xf32>
    %cst_7 = arith.constant 0.000000e+00 : f32
    %7 = vector.broadcast %cst_7 : f32 to vector<8x32xf32>
    %8 = arith.maximumf %6, %7 : vector<8x32xf32>
    %9 = arith.truncf %8 : vector<8x32xf32> to vector<8x32xbf16>
    %c0_8 = arith.constant 0 : index
    %c0_9 = arith.constant 0 : index
    %10 = vector.load %arg6[%c0_8, %c0_9] : memref<32x128xbf16, #tpu.memory_space<vmem>>, vector<32x128xbf16>
    %cst_10 = arith.constant dense<0.000000e+00> : vector<8x128xf32>
    %11 = tpu.matmul %9, %10, %cst_10 {dimension_numbers = #tpu.dot_dimension_numbers<[1], [0], [0], [1], [0, 0, 1, 1], [], []>} : vector<8x32xbf16>, vector<32x128xbf16>, vector<8x128xf32> -> vector<8x128xf32>
    %c0_11 = arith.constant 0 : index
    %c0_12 = arith.constant 0 : index
    %12 = vector.load %arg8[%c0_11, %c0_12] : memref<1x128xf32, #tpu.memory_space<vmem>>, vector<1x128xf32>
    %13 = vector.broadcast %12 : vector<1x128xf32> to vector<8x128xf32>
    %14 = arith.addf %11, %13 : vector<8x128xf32>
    %c0_13 = arith.constant 0 : index
    %c0_14 = arith.constant 0 : index
    %15 = vector.load %arg7[%c0_13, %c0_14] : memref<32x128xf32, #tpu.memory_space<vmem>>, vector<32x128xf32>
    %cst_15 = arith.constant dense<0.000000e+00> : vector<8x128xf32>
    %16 = tpu.matmul %1, %15, %cst_15 {dimension_numbers = #tpu.dot_dimension_numbers<[1], [0], [0], [1], [0, 0, 1, 1], [], []>} : vector<8x32xf32>, vector<32x128xf32>, vector<8x128xf32> -> vector<8x128xf32>
    %c0_16 = arith.constant 0 : index
    %c0_17 = arith.constant 0 : index
    %17 = vector.load %arg9[%c0_16, %c0_17] : memref<1x128xf32, #tpu.memory_space<vmem>>, vector<1x128xf32>
    %18 = vector.broadcast %17 : vector<1x128xf32> to vector<8x128xf32>
    %19 = arith.addf %16, %18 : vector<8x128xf32>
    %20 = vector.extract_strided_slice %14 {offsets = [0, 0], sizes = [8, 32], strides = [1, 1]} : vector<8x128xf32> to vector<8x32xf32>
    %21 = vector.extract_strided_slice %19 {offsets = [0, 0], sizes = [8, 32], strides = [1, 1]} : vector<8x128xf32> to vector<8x32xf32>
    %22 = arith.addf %20, %21 : vector<8x32xf32>
    %23 = arith.negf %22 : vector<8x32xf32>
    %24 = math.exp %23 : vector<8x32xf32>
    %cst_18 = arith.constant 1.000000e+00 : f32
    %25 = vector.broadcast %cst_18 : f32 to vector<8x32xf32>
    %26 = arith.addf %25, %24 : vector<8x32xf32>
    %27 = arith.divf %25, %26 : vector<8x32xf32>
    %28 = vector.extract_strided_slice %14 {offsets = [0, 32], sizes = [8, 32], strides = [1, 1]} : vector<8x128xf32> to vector<8x32xf32>
    %29 = vector.extract_strided_slice %19 {offsets = [0, 32], sizes = [8, 32], strides = [1, 1]} : vector<8x128xf32> to vector<8x32xf32>
    %30 = arith.addf %28, %29 : vector<8x32xf32>
    %31 = arith.negf %30 : vector<8x32xf32>
    %32 = math.exp %31 : vector<8x32xf32>
    %cst_19 = arith.constant 1.000000e+00 : f32
    %33 = vector.broadcast %cst_19 : f32 to vector<8x32xf32>
    %34 = arith.addf %33, %32 : vector<8x32xf32>
    %35 = arith.divf %33, %34 : vector<8x32xf32>
    %36 = vector.extract_strided_slice %14 {offsets = [0, 64], sizes = [8, 32], strides = [1, 1]} : vector<8x128xf32> to vector<8x32xf32>
    %37 = vector.extract_strided_slice %19 {offsets = [0, 64], sizes = [8, 32], strides = [1, 1]} : vector<8x128xf32> to vector<8x32xf32>
    %38 = arith.mulf %27, %37 : vector<8x32xf32>
    %39 = arith.addf %36, %38 : vector<8x32xf32>
    %40 = math.tanh %39 : vector<8x32xf32>
    %cst_20 = arith.constant 1.000000e+00 : f32
    %41 = vector.broadcast %cst_20 : f32 to vector<8x32xf32>
    %42 = arith.subf %41, %35 : vector<8x32xf32>
    %43 = arith.mulf %42, %40 : vector<8x32xf32>
    %44 = arith.mulf %35, %1 : vector<8x32xf32>
    %45 = arith.addf %43, %44 : vector<8x32xf32>
    %46 = arith.truncf %45 : vector<8x32xf32> to vector<8x32xbf16>
    %c0_21 = arith.constant 0 : index
    %c0_22 = arith.constant 0 : index
    %47 = vector.load %arg10[%c0_21, %c0_22] : memref<32x8xbf16, #tpu.memory_space<vmem>>, vector<32x8xbf16>
    %cst_23 = arith.constant dense<0.000000e+00> : vector<8x8xf32>
    %48 = tpu.matmul %46, %47, %cst_23 {dimension_numbers = #tpu.dot_dimension_numbers<[1], [0], [0], [1], [0, 0, 1, 1], [], []>} : vector<8x32xbf16>, vector<32x8xbf16>, vector<8x8xf32> -> vector<8x8xf32>
    %c0_24 = arith.constant 0 : index
    %c0_25 = arith.constant 0 : index
    %49 = vector.load %arg11[%c0_24, %c0_25] : memref<1x8xf32, #tpu.memory_space<vmem>>, vector<1x8xf32>
    %50 = vector.broadcast %49 : vector<1x8xf32> to vector<8x8xf32>
    %51 = arith.addf %48, %50 : vector<8x8xf32>
    %c0_26 = arith.constant 0 : index
    %c0_27 = arith.constant 0 : index
    %52 = vector.load %arg2[%c0_26, %c0_27] : memref<8x8xbf16, #tpu.memory_space<vmem>>, vector<8x8xbf16>
    %53 = arith.extf %52 : vector<8x8xbf16> to vector<8x8xf32>
    %cst_28 = arith.constant 1.000000e+00 : f32
    %54 = vector.broadcast %cst_28 : f32 to vector<8x8xf32>
    %55 = arith.subf %53, %54 : vector<8x8xf32>
    %cst_29 = arith.constant 1.000000e+30 : f32
    %56 = vector.broadcast %cst_29 : f32 to vector<8x8xf32>
    %57 = arith.mulf %55, %56 : vector<8x8xf32>
    %58 = arith.addf %51, %57 : vector<8x8xf32>
    %cst_30 = arith.constant dense<0xFF800000> : vector<8xf32>
    %59 = vector.multi_reduction <maximumf>, %58, %cst_30 [1] : vector<8x8xf32> to vector<8xf32>
    %60 = vector.shape_cast %59 : vector<8xf32> to vector<8x1xf32>
    %61 = vector.broadcast %60 : vector<8x1xf32> to vector<8x8xf32>
    %62 = arith.subf %58, %61 : vector<8x8xf32>
    %63 = math.exp %62 : vector<8x8xf32>
    %cst_31 = arith.constant dense<0.000000e+00> : vector<8xf32>
    %64 = vector.multi_reduction <add>, %63, %cst_31 [1] : vector<8x8xf32> to vector<8xf32>
    %65 = vector.shape_cast %64 : vector<8xf32> to vector<8x1xf32>
    %66 = vector.broadcast %65 : vector<8x1xf32> to vector<8x8xf32>
    %67 = arith.divf %63, %66 : vector<8x8xf32>
    %c0_32 = arith.constant 0 : index
    %c0_33 = arith.constant 0 : index
    %68 = vector.load %arg12[%c0_32, %c0_33] : memref<8x8xf32, #tpu.memory_space<vmem>>, vector<8x8xf32>
    tpu.vector_store %arg12[%c0_32, %c0_33], %67 {strides = array<i32>} : memref<8x8xf32, #tpu.memory_space<vmem>>, vector<8x8xf32>,
    %c0_34 = arith.constant 0 : index
    %c0_35 = arith.constant 0 : index
    %69 = vector.load %arg13[%c0_34, %c0_35] : memref<8x32xf32, #tpu.memory_space<vmem>>, vector<8x32xf32>
    tpu.vector_store %arg13[%c0_34, %c0_35], %45 {strides = array<i32>} : memref<8x32xf32, #tpu.memory_space<vmem>>, vector<8x32xf32>,
    return
  }
  func.func @transform_0(%arg0: i32) -> (i32, i32) {
    %c0_i32 = arith.constant 0 : i32
    %c0_i32_0 = arith.constant 0 : i32
    return %arg0, %c0_i32 : i32, i32
  }
  func.func @transform_1(%arg0: i32) -> (i32, i32) {
    %c0_i32 = arith.constant 0 : i32
    %c0_i32_0 = arith.constant 0 : i32
    return %arg0, %c0_i32 : i32, i32
  }
  func.func @transform_2(%arg0: i32) -> (i32, i32) {
    %c0_i32 = arith.constant 0 : i32
    %c0_i32_0 = arith.constant 0 : i32
    return %arg0, %c0_i32 : i32, i32
  }
  func.func @transform_3(%arg0: i32) -> (i32, i32) {
    %c0_i32 = arith.constant 0 : i32
    %c0_i32_0 = arith.constant 0 : i32
    %c0_i32_1 = arith.constant 0 : i32
    return %c0_i32, %c0_i32_0 : i32, i32
  }
  func.func @transform_4(%arg0: i32) -> (i32, i32) {
    %c0_i32 = arith.constant 0 : i32
    %c0_i32_0 = arith.constant 0 : i32
    %c0_i32_1 = arith.constant 0 : i32
    return %c0_i32, %c0_i32_0 : i32, i32
  }
  func.func @transform_5(%arg0: i32) -> (i32, i32) {
    %c0_i32 = arith.constant 0 : i32
    %c0_i32_0 = arith.constant 0 : i32
    %c0_i32_1 = arith.constant 0 : i32
    return %c0_i32, %c0_i32_0 : i32, i32
  }
  func.func @transform_6(%arg0: i32) -> (i32, i32) {
    %c0_i32 = arith.constant 0 : i32
    %c0_i32_0 = arith.constant 0 : i32
    %c0_i32_1 = arith.constant 0 : i32
    return %c0_i32, %c0_i32_0 : i32, i32
  }
  func.func @transform_7(%arg0: i32) -> (i32, i32) {
    %c0_i32 = arith.constant 0 : i32
    %c0_i32_0 = arith.constant 0 : i32
    %c0_i32_1 = arith.constant 0 : i32
    return %c0_i32, %c0_i32_0 : i32, i32
  }
  func.func @transform_8(%arg0: i32) -> (i32, i32) {
    %c0_i32 = arith.constant 0 : i32
    %c0_i32_0 = arith.constant 0 : i32
    %c0_i32_1 = arith.constant 0 : i32
    return %c0_i32, %c0_i32_0 : i32, i32
  }
  func.func @transform_9(%arg0: i32) -> (i32, i32) {
    %c0_i32 = arith.constant 0 : i32
    %c0_i32_0 = arith.constant 0 : i32
    %c0_i32_1 = arith.constant 0 : i32
    return %c0_i32, %c0_i32_0 : i32, i32
  }
  func.func @transform_10(%arg0: i32) -> (i32, i32) {
    %c0_i32 = arith.constant 0 : i32
    %c0_i32_0 = arith.constant 0 : i32
    %c0_i32_1 = arith.constant 0 : i32
    return %c0_i32, %c0_i32_0 : i32, i32
  }
  func.func @transform_11(%arg0: i32) -> (i32, i32) {
    %c0_i32 = arith.constant 0 : i32
    %c0_i32_0 = arith.constant 0 : i32
    return %arg0, %c0_i32 : i32, i32
  }
  func.func @transform_12(%arg0: i32) -> (i32, i32) {
    %c0_i32 = arith.constant 0 : i32
    %c0_i32_0 = arith.constant 0 : i32
    return %arg0, %c0_i32 : i32, i32
  }
}

</mosaic_0001>

<llo_original>
// kernel: actor_forward.1
$region0: #{actor_forward.1}
  #allocation0 [shape = 'u32[]', space=smem, size = 0x4, offset = 0x4, fixed_abs, tag = 'smem constant byte address 0x4 - core index']
  #allocation1 [shape = 'u32[144,128]{1,0:T(1,128)}', space=vmem, size = 0x12000, scoped, tag = 'internal scratch']
  %s0 = inlined_call_operand.vmem [shape: bf16[8,16], index: 0, kind: input, shape index: {}]
  %s1 = inlined_call_operand.vmem [shape: bf16[8,8], index: 1, kind: input, shape index: {}]
  %s2 = inlined_call_operand.vmem [shape: f32[8,32], index: 2, kind: input, shape index: {}]
  %s3 = inlined_call_operand.vmem [shape: bf16[16,32], index: 3, kind: input, shape index: {}]
  %s4 = inlined_call_operand.vmem [shape: f32[1,32], index: 4, kind: input, shape index: {}]
  %s5 = inlined_call_operand.vmem [shape: bf16[32,128], index: 5, kind: input, shape index: {}]
  %s6 = inlined_call_operand.vmem [shape: f32[32,128], index: 6, kind: input, shape index: {}]
  %s7 = inlined_call_operand.vmem [shape: f32[1,128], index: 7, kind: input, shape index: {}]
  %s8 = inlined_call_operand.vmem [shape: f32[1,128], index: 8, kind: input, shape index: {}]
  %s9 = inlined_call_operand.vmem [shape: bf16[32,8], index: 9, kind: input, shape index: {}]
  %s10 = inlined_call_operand.hbm [shape: f32[1,8], index: 10, kind: input, shape index: {}]
  %s11 = inlined_call_operand.vmem [shape: f32[8,8], index: 11, kind: output, shape index: {0}]
  %s12 = inlined_call_operand.vmem [shape: f32[8,32], index: 12, kind: output, shape index: {1}]
  %13 = xla_tuple %s11, %s12
  %s14 = sld [smem:[#allocation0]]
  $region66: #{actor_forward.1} parent=0
    _
  %s16 = ssub.s32 1, %s14
  %s17 = scalar_select 0, %s16, %s14
  $region1: #{actor_forward.1} parent=0
    #allocation2 [shape = 'u8[512]{0}', space=vmem, size = 0x400, scoped, tag = 'input window, operand 10, single buffered']
    #allocation3 [shape = 's32[1]{0}', space=sflag, size = 0x4, scoped, tag = 'scoped memory for actor_forward.1']
    %18 = vsyncpa [#allocation3], 0
    // Predicated region
    $region2: #{actor_forward.1} parent=1 // pred_check
      _
    $region3: #{actor_forward.1} parent=1 // pred_check_branch
      %20 = sbr.rel (0) target = $region5
    $region4: #{actor_forward.1} parent=1 // pred_region
      _
    $region5: #{actor_forward.1} parent=1 // pred_fallthru
      _
    // Predicated region
    $region6: #{actor_forward.1} parent=1 // pred_check
      _
    $region7: #{actor_forward.1} parent=1 // pred_check_branch
      %22 = sbr.rel (0) target = $region9
    $region8: #{actor_forward.1} parent=1 // pred_region
      _
    $region9: #{actor_forward.1} parent=1 // pred_fallthru
      _
    // Predicated region
    $region10: #{actor_forward.1} parent=1 // pred_check
      _
    $region11: #{actor_forward.1} parent=1 // pred_check_branch
      %24 = sbr.rel (0) target = $region13
    $region12: #{actor_forward.1} parent=1 // pred_region
      _
    $region13: #{actor_forward.1} parent=1 // pred_fallthru
      _
    // Predicated region
    $region14: #{actor_forward.1} parent=1 // pred_check
      _
    $region15: #{actor_forward.1} parent=1 // pred_check_branch
      %26 = sbr.rel (0) target = $region17
    $region16: #{actor_forward.1} parent=1 // pred_region
      _
    $region17: #{actor_forward.1} parent=1 // pred_fallthru
      _
    // Predicated region
    $region18: #{actor_forward.1} parent=1 // pred_check
      _
    $region19: #{actor_forward.1} parent=1 // pred_check_branch
      %28 = sbr.rel (0) target = $region21
    $region20: #{actor_forward.1} parent=1 // pred_region
      _
    $region21: #{actor_forward.1} parent=1 // pred_fallthru
      _
    // Predicated region
    $region22: #{actor_forward.1} parent=1 // pred_check
      _
    $region23: #{actor_forward.1} parent=1 // pred_check_branch
      %30 = sbr.rel (0) target = $region25
    $region24: #{actor_forward.1} parent=1 // pred_region
      _
    $region25: #{actor_forward.1} parent=1 // pred_fallthru
      _
    // Predicated region
    $region26: #{actor_forward.1} parent=1 // pred_check
      _
    $region27: #{actor_forward.1} parent=1 // pred_check_branch
      %32 = sbr.rel (0) target = $region29
    $region28: #{actor_forward.1} parent=1 // pred_region
      _
    $region29: #{actor_forward.1} parent=1 // pred_fallthru
      _
    // Predicated region
    $region30: #{actor_forward.1} parent=1 // pred_check
      _
    $region31: #{actor_forward.1} parent=1 // pred_check_branch
      %34 = sbr.rel (0) target = $region33
    $region32: #{actor_forward.1} parent=1 // pred_region
      _
    $region33: #{actor_forward.1} parent=1 // pred_fallthru
      _
    // Predicated region
    $region34: #{actor_forward.1} parent=1 // pred_check
      _
    $region35: #{actor_forward.1} parent=1 // pred_check_branch
      %36 = sbr.rel (0) target = $region37
    $region36: #{actor_forward.1} parent=1 // pred_region
      _
    $region37: #{actor_forward.1} parent=1 // pred_fallthru
      _
    // Predicated region
    $region38: #{actor_forward.1} parent=1 // pred_check
      _
    $region39: #{actor_forward.1} parent=1 // pred_check_branch
      %38 = sbr.rel (0) target = $region41
    $region40: #{actor_forward.1} parent=1 // pred_region
      _
    $region41: #{actor_forward.1} parent=1 // pred_fallthru
      _
    // Predicated region
    $region42: #{actor_forward.1} parent=1 // pred_check
      _
    $region43: #{actor_forward.1} parent=1 // pred_check_branch
      %40 = sbr.rel (0) target = $region45
    $region44: #{actor_forward.1} parent=1 // pred_region
      %s42 = ssub.s32 16, 16
      %43 = vsyncadd [#allocation3], %s42
      %s45 = sshll.u32 [#allocation2], 4
      %s46 = int_to_ptr.vmem [resolvable:$true] %s45
      %48 = dma.hbm_to_vmem [thread:$0]  %s10, 16, %s46, [#allocation3]
    $region45: #{actor_forward.1} parent=1 // pred_fallthru
      _
    // Predicated region
    $region46: #{actor_forward.1} parent=1 // pred_check
      _
    $region47: #{actor_forward.1} parent=1 // pred_check_branch
      %50 = sbr.rel (0) target = $region49
    $region48: #{actor_forward.1} parent=1 // pred_region
      %51 = dma.done [#allocation3], 16
    $region49: #{actor_forward.1} parent=1 // pred_fallthru
      _
    %v53 = vld [vmem:[%s0] sm:$0xf]
    %v54 = vld [vmem:[%s2] sm:$0xff]
    %v55 = vld [vmem:[%s3] sm:$0xf]
    %v56 = vld [vmem:[%s3 + $0x4] sm:$0xf]
    %v57 = vld [vmem:[%s4] sm:$0x1]
    %v59 = vlaneseq
    %v60 = vshrl.u32 %v59, 7
    %v61 = vsub.s32 0, %v60
    %v62 = vrot.slane %v57, %v61
    %v66 = vunpack.c.l.b16 %v55
    %v67 = vunpack.c.l.b16 %v56
    %v68 = vpack.c.b16 %v67, %v66
    %vm70 = vcmask 130048
    %v72 = vsel %vm70, %v53, 0
    %74 = vmatprep.subr.bf16.mxu0 0
    %75 = vmatpush1.bf16.msra.mxu0 %v68
    %76 = vmatprep.subr.bf16.mxu0 0
    %77 = vmatpush1.bf16.msra.mxu0 0
    %78 = vmatprep.subr.bf16.mxu0 0
    %79 = vmatpush1.bf16.msra.mxu0 0
    %80 = vmatprep.subr.bf16.mxu0 0
    %81 = vmatpush1.bf16.msra.mxu0 0
    %82 = vmatprep.subr.bf16.mxu0 0
    %83 = vmatpush1.bf16.msra.mxu0 0
    %84 = vmatprep.subr.bf16.mxu0 0
    %85 = vmatpush1.bf16.msra.mxu0 0
    %86 = vmatprep.subr.bf16.mxu0 0
    %87 = vmatpush1.bf16.msra.mxu0 0
    %88 = vmatprep.subr.bf16.mxu0 0
    %89 = vmatpush1.bf16.msra.mxu0 0
    %90 = vmatprep.subr.bf16.mxu0 0
    %91 = vmatpush1.bf16.msra.mxu0 0
    %92 = vmatprep.subr.bf16.mxu0 0
    %93 = vmatpush1.bf16.msra.mxu0 0
    %94 = vmatprep.subr.bf16.mxu0 0
    %95 = vmatpush1.bf16.msra.mxu0 0
    %96 = vmatprep.subr.bf16.mxu0 0
    %97 = vmatpush1.bf16.msra.mxu0 0
    %98 = vmatprep.subr.bf16.mxu0 0
    %99 = vmatpush1.bf16.msra.mxu0 0
    %100 = vmatprep.subr.bf16.mxu0 0
    %101 = vmatpush1.bf16.msra.mxu0 0
    %102 = vmatprep.subr.bf16.mxu0 0
    %103 = vmatpush1.bf16.msra.mxu0 0
    %104 = vmatprep.subr.bf16.mxu0 0
    %105 = vmatpush1.bf16.msra.mxu0 0
    %106 = vmatprep.mubr.bf16.mxu0 0
    %107 = vmatmul.mubr.bf16.gmra.mrb[0].mxu0 %v72
    %v108 = vpop.f32.mrb[0].mxu0
    %v109 = vadd.f32 %v62, %v108
    %v110 = vpop.f32.mrb[0].mxu0
    %v111 = vpop.f32.mrb[0].mxu0
    %v112 = vpop.f32.mrb[0].mxu0
    %113 = vdwg.mxu0
    %v114 = vmax.f32 %v109, 0.0
    %v115 = vpack.c.bf16 %v114, %v114
    %v116 = vld [vmem:[%s5] sm:$0xf]
    %v117 = vld [vmem:[%s5 + $0x4] sm:$0xf]
    %v118 = vld [vmem:[%s5 + $0x8] sm:$0xf]
    %v119 = vld [vmem:[%s5 + $0xc] sm:$0xf]
    %v120 = vld [vmem:[%s7] sm:$0x1]
    %v122 = vlaneseq
    %v123 = vshrl.u32 %v122, 7
    %v124 = vsub.s32 0, %v123
    %v125 = vrot.slane %v120, %v124
    %v131 = vunpack.c.l.b16 %v116
    %v132 = vunpack.c.l.b16 %v117
    %v133 = vunpack.c.l.b16 %v118
    %v134 = vunpack.c.l.b16 %v119
    %v135 = vpack.c.b16 %v132, %v131
    %v136 = vpack.c.b16 %v134, %v133
    %vm139 = vcmask 261120
    %v141 = vsel %vm139, %v115, 0
    %143 = vmatprep.subr.bf16.mxu0 0
    %144 = vmatpush1.bf16.msra.mxu0 %v135
    %145 = vmatprep.subr.bf16.mxu0 0
    %146 = vmatpush1.bf16.msra.mxu0 %v136
    %147 = vmatprep.subr.bf16.mxu0 0
    %148 = vmatpush1.bf16.msra.mxu0 0
    %149 = vmatprep.subr.bf16.mxu0 0
    %150 = vmatpush1.bf16.msra.mxu0 0
    %151 = vmatprep.subr.bf16.mxu0 0
    %152 = vmatpush1.bf16.msra.mxu0 0
    %153 = vmatprep.subr.bf16.mxu0 0
    %154 = vmatpush1.bf16.msra.mxu0 0
    %155 = vmatprep.subr.bf16.mxu0 0
    %156 = vmatpush1.bf16.msra.mxu0 0
    %157 = vmatprep.subr.bf16.mxu0 0
    %158 = vmatpush1.bf16.msra.mxu0 0
    %159 = vmatprep.subr.bf16.mxu0 0
    %160 = vmatpush1.bf16.msra.mxu0 0
    %161 = vmatprep.subr.bf16.mxu0 0
    %162 = vmatpush1.bf16.msra.mxu0 0
    %163 = vmatprep.subr.bf16.mxu0 0
    %164 = vmatpush1.bf16.msra.mxu0 0
    %165 = vmatprep.subr.bf16.mxu0 0
    %166 = vmatpush1.bf16.msra.mxu0 0
    %167 = vmatprep.subr.bf16.mxu0 0
    %168 = vmatpush1.bf16.msra.mxu0 0
    %169 = vmatprep.subr.bf16.mxu0 0
    %170 = vmatpush1.bf16.msra.mxu0 0
    %171 = vmatprep.subr.bf16.mxu0 0
    %172 = vmatpush1.bf16.msra.mxu0 0
    %173 = vmatprep.subr.bf16.mxu0 0
    %174 = vmatpush1.bf16.msra.mxu0 0
    %175 = vmatprep.mubr.bf16.mxu0 0
    %176 = vmatmul.mubr.bf16.gmra.mrb[0].mxu0 %v141
    %v177 = vpop.f32.mrb[0].mxu0
    %v178 = vadd.f32 %v125, %v177
    %v179 = vpop.f32.mrb[0].mxu0
    %v180 = vpop.f32.mrb[0].mxu0
    %v181 = vpop.f32.mrb[0].mxu0
    %182 = vdwg.mxu0
    %v183 = vld [vmem:[%s6] sm:$0xff]
    %v184 = vld [vmem:[%s6 + $0x8] sm:$0xff]
    %v185 = vld [vmem:[%s6 + $0x10] sm:$0xff]
    %v186 = vld [vmem:[%s6 + $0x18] sm:$0xff]
    %v187 = vld [vmem:[%s8] sm:$0x1]
    %v189 = vlaneseq
    %v190 = vshrl.u32 %v189, 7
    %v191 = vsub.s32 0, %v190
    %v192 = vrot.slane %v187, %v191
    %v195 = vsel %vm139, %v54, 0
    %197 = vmatprep.subr.mxu0 0.0
    %198 = vmatpush1.msra.mxu0 %v183
    %199 = vmatprep.subr.mxu0 0.0
    %200 = vmatpush1.msra.mxu0 %v184
    %201 = vmatprep.subr.mxu0 0.0
    %202 = vmatpush1.msra.mxu0 %v185
    %203 = vmatprep.subr.mxu0 0.0
    %204 = vmatpush1.msra.mxu0 %v186
    %205 = vmatprep.subr.mxu0 0.0
    %206 = vmatpush1.msra.mxu0 0.0
    %207 = vmatprep.subr.mxu0 0.0
    %208 = vmatpush1.msra.mxu0 0.0
    %209 = vmatprep.subr.mxu0 0.0
    %210 = vmatpush1.msra.mxu0 0.0
    %211 = vmatprep.subr.mxu0 0.0
    %212 = vmatpush1.msra.mxu0 0.0
    %213 = vmatprep.subr.mxu0 0.0
    %214 = vmatpush1.msra.mxu0 0.0
    %215 = vmatprep.subr.mxu0 0.0
    %216 = vmatpush1.msra.mxu0 0.0
    %217 = vmatprep.subr.mxu0 0.0
    %218 = vmatpush1.msra.mxu0 0.0
    %219 = vmatprep.subr.mxu0 0.0
    %220 = vmatpush1.msra.mxu0 0.0
    %221 = vmatprep.subr.mxu0 0.0
    %222 = vmatpush1.msra.mxu0 0.0
    %223 = vmatprep.subr.mxu0 0.0
    %224 = vmatpush1.msra.mxu0 0.0
    %225 = vmatprep.subr.mxu0 0.0
    %226 = vmatpush1.msra.mxu0 0.0
    %227 = vmatprep.subr.mxu0 0.0
    %228 = vmatpush1.msra.mxu0 0.0
    %229 = vmatprep.subr.mxu0 0.0
    %230 = vmatpush1.msra.mxu0 0.0
    %231 = vmatprep.subr.mxu0 0.0
    %232 = vmatpush1.msra.mxu0 0.0
    %233 = vmatprep.subr.mxu0 0.0
    %234 = vmatpush1.msra.mxu0 0.0
    %235 = vmatprep.subr.mxu0 0.0
    %236 = vmatpush1.msra.mxu0 0.0
    %237 = vmatprep.subr.mxu0 0.0
    %238 = vmatpush1.msra.mxu0 0.0
    %239 = vmatprep.subr.mxu0 0.0
    %240 = vmatpush1.msra.mxu0 0.0
    %241 = vmatprep.subr.mxu0 0.0
    %242 = vmatpush1.msra.mxu0 0.0
    %243 = vmatprep.subr.mxu0 0.0
    %244 = vmatpush1.msra.mxu0 0.0
    %245 = vmatprep.subr.mxu0 0.0
    %246 = vmatpush1.msra.mxu0 0.0
    %247 = vmatprep.subr.mxu0 0.0
    %248 = vmatpush1.msra.mxu0 0.0
    %249 = vmatprep.subr.mxu0 0.0
    %250 = vmatpush1.msra.mxu0 0.0
    %251 = vmatprep.subr.mxu0 0.0
    %252 = vmatpush1.msra.mxu0 0.0
    %253 = vmatprep.subr.mxu0 0.0
    %254 = vmatpush1.msra.mxu0 0.0
    %255 = vmatprep.subr.mxu0 0.0
    %256 = vmatpush1.msra.mxu0 0.0
    %257 = vmatprep.subr.mxu0 0.0
    %258 = vmatpush1.msra.mxu0 0.0
    %259 = vmatprep.subr.mxu0 0.0
    %260 = vmatpush1.msra.mxu0 0.0
    %261 = vmatprep.mubr.f32.mxu0 0.0
    %262 = vmatmul.mubr.f32.gmra.mrb[0].mxu0 %v195
    %v263 = vpop.f32.mrb[0].mxu0
    %v264 = vadd.f32 %v192, %v263
    %v265 = vpop.f32.mrb[0].mxu0
    %266 = vdwg.mxu0
    %v267 = vadd.f32 %v178, %v264
    %v268 = vxor.u32 %v267, 2147483648
    %v269 = vmul.f32 %v268, 1.442695
    %v270 = vpow.pop %v269
    %v271 = vadd.f32 %v270, 1.0
    %v272 = vrcp.pop %v271
    %v273 = vmul.f32 1.0, %v272
    %275 = vrot.lane.b32.xlu0 %v264, 64
    %v276 = vpop.permute.xlu0 %275
    %v278 = vmul.f32 %v273, %v276
    %280 = vrot.lane.b32.xlu0 %v278, 64
    %v281 = vpop.permute.xlu0 %280
    %v283 = vadd.f32 %v178, %v281
    %v284 = vtanh.pop %v283
    %v285 = vsub.f32 1.0, %v273
    %287 = vrot.lane.b32.xlu0 %v284, 96
    %v288 = vpop.permute.xlu0 %287
    %v290 = vmul.f32 %v285, %v288
    %291 = vrot.lane.b32.xlu0 %v54, 32
    %v292 = vpop.permute.xlu0 %291
    %v294 = vmul.f32 %v273, %v292
    %v295 = vadd.f32 %v290, %v294
    %v296 = vpack.c.bf16 %v295, %v295
    %v297 = vld [vmem:[%s9] sm:$0xf]
    %v298 = vld [vmem:[%s9 + $0x4] sm:$0xf]
    %v299 = vld [vmem:[%s9 + $0x8] sm:$0xf]
    %v300 = vld [vmem:[%s9 + $0xc] sm:$0xf]
    %v301 = vld [vmem:[#allocation2] sm:$0x1]
    %v303 = vlaneseq
    %v304 = vshrl.u32 %v303, 7
    %v305 = vsub.s32 0, %v304
    %v306 = vrot.slane %v301, %v305
    %309 = vrot.lane.b32.xlu0 %v296, 96
    %v310 = vpop.permute.xlu0 %309
    %v315 = vunpack.c.l.b16 %v297
    %v316 = vunpack.c.l.b16 %v298
    %v317 = vunpack.c.l.b16 %v299
    %v318 = vunpack.c.l.b16 %v300
    %v319 = vpack.c.b16 %v316, %v315
    %v320 = vpack.c.b16 %v318, %v317
    %v324 = vsel %vm139, %v310, 0
    %326 = vmatprep.subr.bf16.mxu0 0
    %327 = vmatpush1.bf16.msra.mxu0 %v319
    %328 = vmatprep.subr.bf16.mxu0 0
    %329 = vmatpush1.bf16.msra.mxu0 %v320
    %330 = vmatprep.subr.bf16.mxu0 0
    %331 = vmatpush1.bf16.msra.mxu0 0
    %332 = vmatprep.subr.bf16.mxu0 0
    %333 = vmatpush1.bf16.msra.mxu0 0
    %334 = vmatprep.subr.bf16.mxu0 0
    %335 = vmatpush1.bf16.msra.mxu0 0
    %336 = vmatprep.subr.bf16.mxu0 0
    %337 = vmatpush1.bf16.msra.mxu0 0
    %338 = vmatprep.subr.bf16.mxu0 0
    %339 = vmatpush1.bf16.msra.mxu0 0
    %340 = vmatprep.subr.bf16.mxu0 0
    %341 = vmatpush1.bf16.msra.mxu0 0
    %342 = vmatprep.subr.bf16.mxu0 0
    %343 = vmatpush1.bf16.msra.mxu0 0
    %344 = vmatprep.subr.bf16.mxu0 0
    %345 = vmatpush1.bf16.msra.mxu0 0
    %346 = vmatprep.subr.bf16.mxu0 0
    %347 = vmatpush1.bf16.msra.mxu0 0
    %348 = vmatprep.subr.bf16.mxu0 0
    %349 = vmatpush1.bf16.msra.mxu0 0
    %350 = vmatprep.subr.bf16.mxu0 0
    %351 = vmatpush1.bf16.msra.mxu0 0
    %352 = vmatprep.subr.bf16.mxu0 0
    %353 = vmatpush1.bf16.msra.mxu0 0
    %354 = vmatprep.subr.bf16.mxu0 0
    %355 = vmatpush1.bf16.msra.mxu0 0
    %356 = vmatprep.subr.bf16.mxu0 0
    %357 = vmatpush1.bf16.msra.mxu0 0
    %358 = vmatprep.mubr.bf16.mxu0 0
    %359 = vmatmul.mubr.bf16.gmra.mrb[0].mxu0 %v324
    %v360 = vpop.f32.mrb[0].mxu0
    %v361 = vadd.f32 %v306, %v360
    %v362 = vpop.f32.mrb[0].mxu0
    %v363 = vpop.f32.mrb[0].mxu0
    %v364 = vpop.f32.mrb[0].mxu0
    %365 = vdwg.mxu0
    %v366 = vld [vmem:[%s1] sm:$0xf]
    %v367 = vunpack.c.l.bf16 %v366
    %v368 = vsub.f32 %v367, 1.0
    %v369 = vmul.f32 %v368, 1e+30
    %v370 = vadd.f32 %v361, %v369
    %vm371 = vcmask 64512
    %v372 = vsel %vm371, %v370, -inf
    %373 = vmax.xlane.f32.xlu0 %v372
    %v374 = vpop.xlane.xlu0 %373
    %v375 = vsub.f32 %v370, %v374
    %v376 = vmul.f32 %v375, 1.442695
    %v377 = vpow.pop %v376
    %v378 = vsel %vm371, %v377, 0.0
    %379 = vadd.xlane.f32.xlu0 %v378
    %v380 = vpop.xlane.xlu0 %379
    %v381 = vrcp.pop %v380
    %v382 = vmul.f32 %v377, %v381
    %383 = vst.msk [vmem:[%s11] sm:$0xff] %vm371, %v382
    %385 = vrot.lane.b32.xlu0 %v295, 96
    %v386 = vpop.permute.xlu0 %385
    %388 = vst.msk [vmem:[%s12] sm:$0xff] %vm139, %v386
    // Predicated region
    $region50: #{actor_forward.1} parent=1 // pred_check
      _
    $region51: #{actor_forward.1} parent=1 // pred_check_branch
      %390 = sbr.rel (0) target = $region53
    $region52: #{actor_forward.1} parent=1 // pred_region
      _
    $region53: #{actor_forward.1} parent=1 // pred_fallthru
      _
    // Predicated region
    $region54: #{actor_forward.1} parent=1 // pred_check
      _
    $region55: #{actor_forward.1} parent=1 // pred_check_branch
      %392 = sbr.rel (0) target = $region57
    $region56: #{actor_forward.1} parent=1 // pred_region
      _
    $region57: #{actor_forward.1} parent=1 // pred_fallthru
      _
    // Predicated region
    $region58: #{actor_forward.1} parent=1 // pred_check
      _
    $region59: #{actor_forward.1} parent=1 // pred_check_branch
      %394 = sbr.rel (0) target = $region61
    $region60: #{actor_forward.1} parent=1 // pred_region
      _
    $region61: #{actor_forward.1} parent=1 // pred_fallthru
      _
    // Predicated region
    $region62: #{actor_forward.1} parent=1 // pred_check
      _
    $region63: #{actor_forward.1} parent=1 // pred_check_branch
      %396 = sbr.rel (0) target = $region65
    $region64: #{actor_forward.1} parent=1 // pred_region
      _
    $region65: #{actor_forward.1} parent=1 // pred_fallthru
      _
    %397 = vsyncpa [#allocation3], 1

</llo_original>
